<compile_context>
chip_gen: v7x
topology: tpu7x:2x2x1
jax: 0.10.0
libtpu: 0.0.40
codegen_flags: <defaults>
</compile_context>

<pallas_src>
import math
import functools

import jax
import jax.numpy as jnp
from jax.experimental import pallas as pl
from jax.experimental.pallas import tpu as pltpu


_VMEM_LIMIT = 32 * 1024 * 1024  # safe on v5e/v6e/v7x; far above what tiles need
_MASK_VALUE = -1e30


# ----------------------------------------------------------------------------
# Tiled matmul (used for fused QKV projection and the output projection)
# ----------------------------------------------------------------------------
def _matmul_kernel(x_ref, w_ref, o_ref, acc_ref):
    @pl.when(pl.program_id(2) == 0)
    def _():
        acc_ref[...] = jnp.zeros_like(acc_ref)

    acc_ref[...] += jnp.dot(
        x_ref[...], w_ref[...], preferred_element_type=jnp.float32
    )

    @pl.when(pl.program_id(2) == pl.num_programs(2) - 1)
    def _():
        o_ref[...] = acc_ref[...].astype(o_ref.dtype)


def pallas_matmul(x, w, *, tm=256, tn=256, tk=512, out_dtype=None):
    """x: (M, K), w: (K, N) -> (M, N); f32 accumulation, tiled + pipelined."""
    M, K = x.shape
    K2, N = w.shape
    assert K == K2
    tm, tn, tk = min(tm, M), min(tn, N), min(tk, K)
    assert M % tm == 0 and N % tn == 0 and K % tk == 0, (M, N, K, tm, tn, tk)
    out_dtype = out_dtype or x.dtype

    return pl.pallas_call(
        _matmul_kernel,
        out_shape=jax.ShapeDtypeStruct((M, N), out_dtype),
        grid_spec=pltpu.PrefetchScalarGridSpec(
            num_scalar_prefetch=0,
            grid=(M // tm, N // tn, K // tk),
            in_specs=[
                pl.BlockSpec((tm, tk), lambda i, j, k: (i, k)),
                pl.BlockSpec((tk, tn), lambda i, j, k: (k, j)),
            ],
            out_specs=pl.BlockSpec((tm, tn), lambda i, j, k: (i, j)),
            scratch_shapes=[pltpu.VMEM((tm, tn), jnp.float32)],
        ),
        compiler_params=pltpu.CompilerParams(
            dimension_semantics=("parallel", "parallel", "arbitrary"),
            vmem_limit_bytes=_VMEM_LIMIT,
        ),
    )(x, w)


# ----------------------------------------------------------------------------
# RoPE kernel: x * cos + roll(x, half) * (sign * sin), f32 math, pltpu.roll
# (rotate_half == roll-by-half followed by a [-1]*half ++ [+1]*half sign,
#  which is pre-folded into the `sin` table in the wrapper.)
# ----------------------------------------------------------------------------
def _rope_kernel(x_ref, cos_ref, sin_ref, o_ref, *, half):
    x = x_ref[0].astype(jnp.float32)                     # (bq, D)
    rot = pltpu.roll(x, shift=half, axis=1)              # [x2 | x1]
    o_ref[0] = (x * cos_ref[...] + rot * sin_ref[...]).astype(o_ref.dtype)


def pallas_rope(x, cos, sin_signed, *, block=256):
    """x: (BH, S, D); cos/sin_signed: (S, D) f32 tables."""
    BH, S, D = x.shape
    bq = min(block, S)
    assert S % bq == 0

    kernel = functools.partial(_rope_kernel, half=D // 2)
    return pl.pallas_call(
        kernel,
        out_shape=jax.ShapeDtypeStruct(x.shape, x.dtype),
        grid_spec=pltpu.PrefetchScalarGridSpec(
            num_scalar_prefetch=0,
            grid=(BH, S // bq),
            in_specs=[
                pl.BlockSpec((1, bq, D), lambda h, i: (h, i, 0)),
                pl.BlockSpec((bq, D), lambda h, i: (i, 0)),
                pl.BlockSpec((bq, D), lambda h, i: (i, 0)),
            ],
            out_specs=pl.BlockSpec((1, bq, D), lambda h, i: (h, i, 0)),
        ),
        compiler_params=pltpu.CompilerParams(
            dimension_semantics=("parallel", "parallel"),
            vmem_limit_bytes=_VMEM_LIMIT,
        ),
    )(x, cos, sin_signed)


# ----------------------------------------------------------------------------
# Flash attention: online softmax over KV tiles, in-kernel causal mask,
# GQA via index_map, softmax in f32, VMEM scratch accumulators.
# q is expected pre-RoPE'd and pre-scaled by 1/sqrt(D); k pre-RoPE'd.
# ----------------------------------------------------------------------------
def _flash_attn_kernel(q_ref, k_ref, v_ref, o_ref, m_ref, l_ref, acc_ref,
                       *, block_q, block_k, causal, approx_recip):
    qi = pl.program_id(1)
    ki = pl.program_id(2)

    @pl.when(ki == 0)
    def _init():
        m_ref[...] = jnp.full_like(m_ref, -jnp.inf)
        l_ref[...] = jnp.zeros_like(l_ref)
        acc_ref[...] = jnp.zeros_like(acc_ref)

    def compute():
        q = q_ref[0]                                     # (bq, D)
        k = k_ref[0]                                     # (bk, D)
        v = v_ref[0]                                     # (bk, D)

        # scores = q @ k^T (contract head_dim), f32 accumulation on the MXU
        s = jax.lax.dot_general(
            q, k, (((1,), (1,)), ((), ())),
            preferred_element_type=jnp.float32,
        )                                                # (bq, bk)

        if causal:
            row = qi * block_q + jax.lax.broadcasted_iota(
                jnp.int32, (block_q, block_k), 0)
            col = ki * block_k + jax.lax.broadcasted_iota(
                jnp.int32, (block_q, block_k), 1)
            s = jnp.where(row >= col, s, _MASK_VALUE)

        m_prev = m_ref[...]                              # (bq, 1)
        m_cur = jnp.max(s, axis=-1, keepdims=True)
        m_new = jnp.maximum(m_prev, m_cur)
        alpha = jnp.exp(m_prev - m_new)
        p = jnp.exp(s - m_new)                           # f32 softmax numerator

        l_ref[...] = alpha * l_ref[...] + jnp.sum(p, axis=-1, keepdims=True)
        acc_ref[...] = alpha * acc_ref[...] + jnp.dot(
            p.astype(v.dtype), v, preferred_element_type=jnp.float32)
        m_ref[...] = m_new

    if causal:
        # Skip KV tiles that are entirely above the causal diagonal.
        @pl.when(ki * block_k < (qi + 1) * block_q)
        def _():
            compute()
    else:
        compute()

    @pl.when(ki == pl.num_programs(2) - 1)
    def _store():
        inv_l = pl.reciprocal(l_ref[...], approx=approx_recip)
        o_ref[0] = (acc_ref[...] * inv_l).astype(o_ref.dtype)


def pallas_flash_attention(q, k, v, *, num_heads, num_kv_heads,
                           block_q=128, block_k=128, causal=True):
    """
    q:    (B*num_heads,    S, D)  -- RoPE'd and pre-scaled by 1/sqrt(D)
    k, v: (B*num_kv_heads, S, D)  -- k RoPE'd
    returns (B*num_heads, S, D)
    """
    BH, S, D = q.shape
    n_rep = num_heads // num_kv_heads
    bq, bk = min(block_q, S), min(block_k, S)
    assert S % bq == 0 and S % bk == 0

    def q_map(bh, qi, ki):
        return (bh, qi, 0)

    def kv_map(bh, qi, ki):
        b = bh // num_heads
        h = bh % num_heads
        return (b * num_kv_heads + h // n_rep, ki, 0)

    kernel = functools.partial(
        _flash_attn_kernel,
        block_q=bq, block_k=bk, causal=causal,
        approx_recip=bool(q.dtype == jnp.bfloat16),
    )

    return pl.pallas_call(
        kernel,
        out_shape=jax.ShapeDtypeStruct((BH, S, D), q.dtype),
        grid_spec=pltpu.PrefetchScalarGridSpec(
            num_scalar_prefetch=0,
            grid=(BH, S // bq, S // bk),
            in_specs=[
                pl.BlockSpec((1, bq, D), q_map),
                pl.BlockSpec((1, bk, D), kv_map),
                pl.BlockSpec((1, bk, D), kv_map),
            ],
            out_specs=pl.BlockSpec((1, bq, D), q_map),
            scratch_shapes=[
                pltpu.VMEM((bq, 1), jnp.float32),   # running max m
                pltpu.VMEM((bq, 1), jnp.float32),   # running sum l
                pltpu.VMEM((bq, D), jnp.float32),   # output accumulator
            ],
        ),
        compiler_params=pltpu.CompilerParams(
            dimension_semantics=("parallel", "parallel", "arbitrary"),
            vmem_limit_bytes=_VMEM_LIMIT,
        ),
    )(q, k, v)


# ----------------------------------------------------------------------------
# Rotary embedding cache (mirror of RotaryEmbedding._set_cos_sin_cache)
# ----------------------------------------------------------------------------
def rope_cos_sin(head_dim, seq_len, base=10000.0):
    inv_freq = 1.0 / (base ** (jnp.arange(0, head_dim, 2, dtype=jnp.float32) / head_dim))
    t = jnp.arange(seq_len, dtype=jnp.float32)
    freqs = jnp.einsum("i,j->ij", t, inv_freq)          # (S, D/2)
    emb = jnp.concatenate([freqs, freqs], axis=-1)      # (S, D)
    return jnp.cos(emb), jnp.sin(emb)


# ----------------------------------------------------------------------------
# Full forward (matches LLama2Attention.forward with past_key_value=None,
# output_attentions=False, use_cache=False, causal additive mask)
# ----------------------------------------------------------------------------
def llama2_attention_forward(hidden_states, params, config, *, causal=True,
                             compute_dtype=None):
    B, S, H = hidden_states.shape
    nH = config["num_attention_heads"]
    nKV = config["num_key_value_heads"]
    D = H // nH

    dt = compute_dtype if compute_dtype is not None else hidden_states.dtype
    x2d = hidden_states.astype(dt).reshape(B * S, H)

    # Fused QKV projection: one matmul over concatenated weights.
    w_qkv = jnp.concatenate(
        [params["wq"], params["wk"], params["wv"]], axis=1).astype(dt)
    wo = params["wo"].astype(dt)

    qkv = pallas_matmul(x2d, w_qkv)                      # (B*S, (nH+2*nKV)*D)
    q = qkv[:, : nH * D]
    k = qkv[:, nH * D: (nH + nKV) * D]
    v = qkv[:, (nH + nKV) * D:]

    def to_heads(t, nh):                                 # (B*S, nh*D) -> (B*nh, S, D)
        return t.reshape(B, S, nh, D).transpose(0, 2, 1, 3).reshape(B * nh, S, D)

    q = to_heads(q, nH)
    k = to_heads(k, nKV)
    v = to_heads(v, nKV)

    # RoPE tables in f32.  rotate_half sign folded into sin; 1/sqrt(D) folded
    # into the Q tables (cheaper than scaling the (S,S) scores).
    cos, sin = rope_cos_sin(D, S, base=config["rope_theta"])
    sign = jnp.concatenate([-jnp.ones((D // 2,), jnp.float32),
                            jnp.ones((D // 2,), jnp.float32)])
    sin_signed = sin * sign
    scale = 1.0 / math.sqrt(D)

    q = pallas_rope(q, cos * scale, sin_signed * scale)  # RoPE + scale on Q
    k = pallas_rope(k, cos, sin_signed)                  # RoPE once per KV head

    attn = pallas_flash_attention(
        q, k, v, num_heads=nH, num_kv_heads=nKV, causal=causal)  # (B*nH, S, D)

    attn = attn.reshape(B, nH, S, D).transpose(0, 2, 1, 3).reshape(B * S, H)
    out = pallas_matmul(attn, wo).reshape(B, S, H)
    return out


# ----------------------------------------------------------------------------
# Pure-JAX reference (mirrors the PyTorch module) for verification
# ----------------------------------------------------------------------------
def reference_forward(hidden_states, params, config, *, causal=True):
    B, S, H = hidden_states.shape
    nH = config["num_attention_heads"]
    nKV = config["num_key_value_heads"]
    D = H // nH
    n_rep = nH // nKV

    x = hidden_states.astype(jnp.float32)
    q = (x @ params["wq"]).reshape(B, S, nH, D).transpose(0, 2, 1, 3)
    k = (x @ params["wk"]).reshape(B, S, nKV, D).transpose(0, 2, 1, 3)
    v = (x @ params["wv"]).reshape(B, S, nKV, D).transpose(0, 2, 1, 3)

    cos, sin = rope_cos_sin(D, S, base=config["rope_theta"])

    def rot_half(t):
        t1, t2 = t[..., : D // 2], t[..., D // 2:]
        return jnp.concatenate([-t2, t1], axis=-1)

    q = q * cos + rot_half(q) * sin
    k = k * cos + rot_half(k) * sin

    k = jnp.repeat(k, n_rep, axis=1)
    v = jnp.repeat(v, n_rep, axis=1)

    scores = jnp.einsum("bhqd,bhkd->bhqk", q, k) / math.sqrt(D)
    if causal:
        m = jnp.tril(jnp.ones((S, S), dtype=bool))
        scores = jnp.where(m, scores, _MASK_VALUE)
    p = jax.nn.softmax(scores.astype(jnp.float32), axis=-1)
    out = jnp.einsum("bhqk,bhkd->bhqd", p, v)
    out = out.transpose(0, 2, 1, 3).reshape(B, S, H)
    return out @ params["wo"]


# ----------------------------------------------------------------------------
if __name__ == "__main__":
    # Small config consistent with the module (head_dim=128 like real Llama2).
    config = dict(
        hidden_size=512,
        num_attention_heads=4,
        num_key_value_heads=2,   # exercises GQA (n_rep = 2)
        rope_theta=10000.0,
    )
    B, S = 2, 16
    H = config["hidden_size"]
    nH = config["num_attention_heads"]
    nKV = config["num_key_value_heads"]
    D = H // nH

    key = jax.random.PRNGKey(0)
    k_x, k_q, k_k, k_v, k_o = jax.random.split(key, 5)

    hidden_states = jax.random.normal(k_x, (B, S, H), dtype=jnp.float32)

    init = 0.02
    params = {
        # weights stored as (in_features, out_features) == W.T of nn.Linear
        "wq": init * jax.random.normal(k_q, (H, nH * D), dtype=jnp.float32),
        "wk": init * jax.random.normal(k_k, (H, nKV * D), dtype=jnp.float32),
        "wv": init * jax.random.normal(k_v, (H, nKV * D), dtype=jnp.float32),
        "wo": init * jax.random.normal(k_o, (nH * D, H), dtype=jnp.float32),
    }

    ref = reference_forward(hidden_states, params, config, causal=True)

    # f32 path: check against the pure-JAX reference.
    out_f32 = llama2_attention_forward(
        hidden_states, params, config, causal=True, compute_dtype=jnp.float32)
    out_f32 = jax.block_until_ready(out_f32)
    assert out_f32.shape == (B, S, H)
    assert jnp.allclose(out_f32, ref, atol=1e-3, rtol=1e-3), "f32 mismatch vs reference"

    # bf16 path (MXU-friendly inputs, f32 accumulation): loose check.
    out_bf16 = llama2_attention_forward(
        hidden_states, params, config, causal=True, compute_dtype=jnp.bfloat16)
    out_bf16 = jax.block_until_ready(out_bf16)
    max_err = jnp.max(jnp.abs(out_bf16.astype(jnp.float32) - ref))
    assert max_err < 5e-2, f"bf16 mismatch vs reference: {max_err}"

    print("KERNEL_OK")
</pallas_src>

<mosaic_0001>
module attributes {stable_mosaic.version = 11 : i64} {
  func.func @_matmul_kernel(%arg0: i32, %arg1: i32, %arg2: i32, %arg3: memref<32x512xf32, #tpu.memory_space<vmem>>, %arg4: memref<512x256xf32, #tpu.memory_space<vmem>>, %arg5: memref<32x256xf32, #tpu.memory_space<vmem>>, %arg6: memref<32x256xf32, #tpu.memory_space<vmem>>) attributes {dimension_semantics = [#tpu.dimension_semantics<parallel>, #tpu.dimension_semantics<parallel>, #tpu.dimension_semantics<arbitrary>], iteration_bounds = array<i64: 1, 4, 1>, scalar_prefetch = 0 : i64, scratch_operands = 1 : i64, tpu.core_type = #tpu.core_type<tc>, window_params = [{transform_indices = @transform_0, window_bounds = array<i64: 32, 512>}, {transform_indices = @transform_1, window_bounds = array<i64: 512, 256>}, {transform_indices = @transform_2, window_bounds = array<i64: 32, 256>}]} {
    %c0_i32 = arith.constant 0 : i32
    %0 = arith.cmpi eq, %arg2, %c0_i32 : i32
    %1 = arith.extui %0 : i1 to i32
    %c0_i32_0 = arith.constant 0 : i32
    %2 = arith.cmpi ne, %1, %c0_i32_0 : i32
    scf.if %2 {
      %cst_10 = arith.constant 0.000000e+00 : f32
      %12 = vector.broadcast %cst_10 : f32 to vector<32x256xf32>
      %c0_11 = arith.constant 0 : index
      %c0_12 = arith.constant 0 : index
      %13 = vector.load %arg6[%c0_11, %c0_12] : memref<32x256xf32, #tpu.memory_space<vmem>>, vector<32x256xf32>
      tpu.vector_store %arg6[%c0_11, %c0_12], %12 {strides = array<i32>} : memref<32x256xf32, #tpu.memory_space<vmem>>, vector<32x256xf32>,
    } else {
    }
    %c0 = arith.constant 0 : index
    %c0_1 = arith.constant 0 : index
    %3 = vector.load %arg6[%c0, %c0_1] : memref<32x256xf32, #tpu.memory_space<vmem>>, vector<32x256xf32>
    %c0_2 = arith.constant 0 : index
    %c0_3 = arith.constant 0 : index
    %4 = vector.load %arg3[%c0_2, %c0_3] : memref<32x512xf32, #tpu.memory_space<vmem>>, vector<32x512xf32>
    %c0_4 = arith.constant 0 : index
    %c0_5 = arith.constant 0 : index
    %5 = vector.load %arg4[%c0_4, %c0_5] : memref<512x256xf32, #tpu.memory_space<vmem>>, vector<512x256xf32>
    %cst = arith.constant dense<0.000000e+00> : vector<32x256xf32>
    %6 = tpu.matmul %4, %5, %cst {dimension_numbers = #tpu.dot_dimension_numbers<[1], [0], [0], [1], [0, 0, 1, 1], [], []>} : vector<32x512xf32>, vector<512x256xf32>, vector<32x256xf32> -> vector<32x256xf32>
    %7 = arith.addf %3, %6 : vector<32x256xf32>
    %c0_6 = arith.constant 0 : index
    %c0_7 = arith.constant 0 : index
    %8 = vector.load %arg6[%c0_6, %c0_7] : memref<32x256xf32, #tpu.memory_space<vmem>>, vector<32x256xf32>
    tpu.vector_store %arg6[%c0_6, %c0_7], %7 {strides = array<i32>} : memref<32x256xf32, #tpu.memory_space<vmem>>, vector<32x256xf32>,
    %c0_i32_8 = arith.constant 0 : i32
    %9 = arith.cmpi eq, %arg2, %c0_i32_8 : i32
    %10 = arith.extui %9 : i1 to i32
    %c0_i32_9 = arith.constant 0 : i32
    %11 = arith.cmpi ne, %10, %c0_i32_9 : i32
    scf.if %11 {
      %c0_10 = arith.constant 0 : index
      %c0_11 = arith.constant 0 : index
      %12 = vector.load %arg6[%c0_10, %c0_11] : memref<32x256xf32, #tpu.memory_space<vmem>>, vector<32x256xf32>
      %c0_12 = arith.constant 0 : index
      %c0_13 = arith.constant 0 : index
      %13 = vector.load %arg5[%c0_12, %c0_13] : memref<32x256xf32, #tpu.memory_space<vmem>>, vector<32x256xf32>
      tpu.vector_store %arg5[%c0_12, %c0_13], %12 {strides = array<i32>} : memref<32x256xf32, #tpu.memory_space<vmem>>, vector<32x256xf32>,
    } else {
    }
    return
  }
  func.func @transform_0(%arg0: i32, %arg1: i32, %arg2: i32) -> (i32, i32) {
    %c0_i32 = arith.constant 0 : i32
    return %arg0, %arg2 : i32, i32
  }
  func.func @transform_1(%arg0: i32, %arg1: i32, %arg2: i32) -> (i32, i32) {
    %c0_i32 = arith.constant 0 : i32
    return %arg2, %arg1 : i32, i32
  }
  func.func @transform_2(%arg0: i32, %arg1: i32, %arg2: i32) -> (i32, i32) {
    %c0_i32 = arith.constant 0 : i32
    return %arg0, %arg1 : i32, i32
  }
}

</mosaic_0001>

<llo_original>
// kernel: tpu_custom_call.1
$region0: #{tpu_custom_call.1}
  #allocation0 [shape = 'u32[]', space=smem, size = 0x4, offset = 0x4, fixed_abs, tag = 'smem constant byte address 0x4 - core index']
  #allocation1 [shape = 'u32[144,128]{1,0:T(1,128)}', space=vmem, size = 0x12000, scoped, tag = 'internal scratch']
  #allocation2 [shape = 'f32[32,256]{1,0:T(8,128)}', space=vmem, size = 0x8000, scoped, tag = 'scratch operand']
  %s0 = inlined_call_operand.hbm [shape: f32[32,512], index: 0, kind: input, shape index: {}]
  %s1 = inlined_call_operand.hbm [shape: f32[512,1024], index: 1, kind: input, shape index: {}]
  %s2 = inlined_call_operand.hbm [shape: f32[32,1024], index: 2, kind: output, shape index: {}]
  %s3 = sld [smem:[#allocation0]]
  $region57: #{tpu_custom_call.1} parent=0
    _
  %s5 = ssub.s32 1, %s3
  %s6 = scalar_select 0, %s5, %s3
  $region1: #{tpu_custom_call.1} parent=0
    #allocation3 [shape = 'u8[65536]{0}', space=vmem, size = 0x10000, scoped, tag = 'input window, operand 0, single buffered']
    #allocation4 [shape = 's32[2]{0}', space=sflag, size = 0x8, scoped, tag = 'scoped memory for tpu_custom_call.1']
    #allocation5 [shape = 's32[2]{0}', space=sflag, size = 0x8, scoped, tag = 'scoped memory for tpu_custom_call.1']
    #allocation6 [shape = 'u8[1048576]{0}', space=vmem, size = 0x100000, scoped, tag = 'input window, operand 1']
    #allocation7 [shape = 's32[2]{0}', space=sflag, size = 0x8, scoped, tag = 'scoped memory for tpu_custom_call.1']
    #allocation8 [shape = 'u8[65536]{0}', space=vmem, size = 0x10000, scoped, tag = 'output window, operand 0']
    %7 = vsyncpa [#allocation4], 0
    %8 = vsyncpa [#allocation7], 0
    %s9 = scalar_lea.sflag [#allocation7], 1
    %10 = vsyncpa %s9, 0
    %11 = vsyncpa [#allocation5], 0
    %s12 = scalar_lea.sflag [#allocation5], 1
    %13 = vsyncpa %s12, 0
    loop: start=0, step=1, limit=6
    $region2: #{tpu_custom_call.1} parent=1 // loop_pre_header
      _
    $region3: #{tpu_custom_call.1} parent=1 // loop_header
      %s15 = sphi 0, %s19
      %p16 = scmp.ge.s32.totalorder %s15, 6
      %s22 = sphi 0, %s41
      %s23 = sphi 0, %s37
      %s24 = sphi 0, %s33
      %s25 = sphi 0, %s22
      %s26 = sphi 0, %s23
      %s27 = sphi 0, %s24
      %s28 = sphi 0, %s25
      %s29 = sphi 0, %s26
      %s30 = sphi 0, %s27
      %s46 = sphi 0, %s48
      %s49 = sphi 0, %s46
      %s50 = sphi 0, %s49
      %s66 = sphi 0, %s50
      %s74 = sphi 0, %s76
      %s77 = sphi 0, %s74
      %s78 = sphi 0, %s77
      %s94 = sphi 0, %s78
      %s102 = sphi 0, %s104
      %s105 = sphi 0, %s102
      %s106 = sphi 0, %s105
      %s122 = sphi 0, %s106
    $region4: #{tpu_custom_call.1} parent=1 // loop_header_branch
      %18 = sbr.rel (%p16) target = $region8
    $region5: #{tpu_custom_call.1} parent=1 // loop_body
      %s20 = ssub.s32 %s15, 1
      %s21 = ssub.s32 %s15, 2
      %s31 = sadd.s32 1, %s24
      %p32 = scmp.ge.s32.totalorder %s31, 1
      %s33 = scalar_select %p32, 0, %s31
      %s34 = sadd.s32 1, %s23
      %s35 = scalar_select %p32, %s34, %s23
      %p36 = scmp.ge.s32.totalorder %s35, 4
      %s37 = scalar_select %p36, 0, %s35
      %s38 = sadd.s32 1, %s22
      %s39 = scalar_select %p36, %s38, %s22
      %p40 = scmp.ge.s32.totalorder %s39, 1
      %s41 = scalar_select %p40, 0, %s39
      %s42 = ssub.s32 %s22, %s41
      %s43 = ssub.s32 %s24, %s33
      %s44 = sor.u32 %s42, %s43
      %p45 = scmp.eq.s32.totalorder %s44, 0
      %s47 = sadd.s32 %s46, 1
      %s48 = scalar_select %p45, %s46, %s47
      %p51 = pneg %p45
      %p52 = scmp.eq.s32.totalorder %s15, 3
      %p53 = por %p51, %p52
      %p54 = scmp.ne.s32.totalorder %s46, %s49
      %p55 = scmp.eq.s32.totalorder %s15, 0
      %p56 = por %p54, %p55
      %p57 = scmp.ne.s32.totalorder %s46, %s49
      %p58 = scmp.eq.s32.totalorder %s20, 3
      %p59 = por %p57, %p58
      %p60 = scmp.ne.s32.totalorder %s49, %s50
      %p61 = scmp.eq.s32.totalorder %s20, 0
      %p62 = por %p60, %p61
      %p63 = scmp.ne.s32.totalorder %s49, %s50
      %p64 = scmp.eq.s32.totalorder %s21, 3
      %p65 = por %p63, %p64
      %p67 = scmp.ne.s32.totalorder %s50, %s66
      %p68 = scmp.eq.s32.totalorder %s21, 0
      %p69 = por %p67, %p68
      %s70 = ssub.s32 %s24, %s33
      %s71 = ssub.s32 %s23, %s37
      %s72 = sor.u32 %s70, %s71
      %p73 = scmp.eq.s32.totalorder %s72, 0
      %s75 = sadd.s32 %s74, 1
      %s76 = scalar_select %p73, %s74, %s75
      %p79 = pneg %p73
      %p80 = scmp.eq.s32.totalorder %s15, 3
      %p81 = por %p79, %p80
      %p82 = scmp.ne.s32.totalorder %s74, %s77
      %p83 = scmp.eq.s32.totalorder %s15, 0
      %p84 = por %p82, %p83
      %p85 = scmp.ne.s32.totalorder %s74, %s77
      %p86 = scmp.eq.s32.totalorder %s20, 3
      %p87 = por %p85, %p86
      %p88 = scmp.ne.s32.totalorder %s77, %s78
      %p89 = scmp.eq.s32.totalorder %s20, 0
      %p90 = por %p88, %p89
      %p91 = scmp.ne.s32.totalorder %s77, %s78
      %p92 = scmp.eq.s32.totalorder %s21, 3
      %p93 = por %p91, %p92
      %p95 = scmp.ne.s32.totalorder %s78, %s94
      %p96 = scmp.eq.s32.totalorder %s21, 0
      %p97 = por %p95, %p96
      %s98 = ssub.s32 %s22, %s41
      %s99 = ssub.s32 %s23, %s37
      %s100 = sor.u32 %s98, %s99
      %p101 = scmp.eq.s32.totalorder %s100, 0
      %s103 = sadd.s32 %s102, 1
      %s104 = scalar_select %p101, %s102, %s103
      %p107 = pneg %p101
      %p108 = scmp.eq.s32.totalorder %s15, 3
      %p109 = por %p107, %p108
      %p110 = scmp.ne.s32.totalorder %s102, %s105
      %p111 = scmp.eq.s32.totalorder %s15, 0
      %p112 = por %p110, %p111
      %p113 = scmp.ne.s32.totalorder %s102, %s105
      %p114 = scmp.eq.s32.totalorder %s20, 3
      %p115 = por %p113, %p114
      %p116 = scmp.ne.s32.totalorder %s105, %s106
      %p117 = scmp.eq.s32.totalorder %s20, 0
      %p118 = por %p116, %p117
      %p119 = scmp.ne.s32.totalorder %s105, %s106
      %p120 = scmp.eq.s32.totalorder %s21, 3
      %p121 = por %p119, %p120
      %p123 = scmp.ne.s32.totalorder %s106, %s122
      %p124 = scmp.eq.s32.totalorder %s21, 0
      %p125 = por %p123, %p124
      %p126 = scmp.le.s32.totalorder 1, %s15
      %p127 = scmp.lt.s32.totalorder %s15, 5
      %p128 = pnand %p126, %p127
      %p129 = pneg %p128
      // Predicated region
      $region9: #{tpu_custom_call.1} parent=5 // pred_check
        _
      $region10: #{tpu_custom_call.1} parent=5 // pred_check_branch
        %131 = sbr.rel (%p128) target = $region12
      $region11: #{tpu_custom_call.1} parent=5 // pred_region
        %s132 = ssub.s32 %s15, 1
        // Predicated region
        $region13: #{tpu_custom_call.1} parent=11 // pred_check
          %p133 = pneg %p62
        $region14: #{tpu_custom_call.1} parent=11 // pred_check_branch
          %135 = sbr.rel (%p133) target = $region16
        $region15: #{tpu_custom_call.1} parent=11 // pred_region
          %s136 = smul.u32 4, %s25
          %s137 = smul.u32 4, %s27
          %s139 = ssub.s32 2048, 2048
          %140 = vsyncadd [#allocation4], %s139
          %s141 = smul.addr %s136, 4
          %s142 = sadd.s32 %s137, %s141
          %s143 = smul.addr %s142, 128
          %s144 = scalar_lea.hbm %s0, %s143
          %s145 = sshll.u32 [#allocation3], 4
          %s146 = int_to_ptr.vmem [resolvable:$true] %s145
          %151 = dma.hbm_to_vmem [thread:$0]  %s144, 2048, %s146, [#allocation4], 512, 512, 32
        $region16: #{tpu_custom_call.1} parent=11 // pred_fallthru
          _
      $region12: #{tpu_custom_call.1} parent=5 // pred_fallthru
        _
      %p152 = scmp.lt.s32.totalorder %s15, 4
      // Predicated region
      $region17: #{tpu_custom_call.1} parent=5 // pred_check
        %p153 = pneg %p152
      $region18: #{tpu_custom_call.1} parent=5 // pred_check_branch
        %155 = sbr.rel (%p153) target = $region20
      $region19: #{tpu_custom_call.1} parent=5 // pred_region
        // Predicated region
        $region21: #{tpu_custom_call.1} parent=19 // pred_check
          %p156 = pneg %p84
        $region22: #{tpu_custom_call.1} parent=19 // pred_check_branch
          %158 = sbr.rel (%p156) target = $region24
        $region23: #{tpu_custom_call.1} parent=19 // pred_region
          %s159 = sand.u32 %s74, 1
          %s160 = scalar_lea.sflag [#allocation7], %s159
          %s161 = sand.u32 %s74, 1
          %s162 = smul.addr %s161, 1024
          %s163 = scalar_lea.vmem [#allocation6], %s162
          %s164 = smul.u32 64, %s24
          %s165 = smul.u32 2, %s23
          %s167 = ssub.s32 16384, 16384
          %168 = vsyncadd %s160, %s167
          %s169 = smul.addr %s164, 8
          %s170 = sadd.s32 %s165, %s169
          %s171 = smul.addr %s170, 128
          %s172 = scalar_lea.hbm %s1, %s171
          %s173 = sshll.u32 %s163, 4
          %s174 = int_to_ptr.vmem [resolvable:$true] %s173
          %179 = dma.hbm_to_vmem [thread:$0]  %s172, 16384, %s174, %s160, 1024, 256, 16
        $region24: #{tpu_custom_call.1} parent=19 // pred_fallthru
          _
      $region20: #{tpu_custom_call.1} parent=5 // pred_fallthru
        _
      %p180 = scmp.le.s32.totalorder 1, %s15
      %p181 = scmp.lt.s32.totalorder %s15, 5
      %p182 = pnand %p180, %p181
      %p183 = pneg %p182
      // Predicated region
      $region25: #{tpu_custom_call.1} parent=5 // pred_check
        _
      $region26: #{tpu_custom_call.1} parent=5 // pred_check_branch
        %185 = sbr.rel (%p182) target = $region28
      $region27: #{tpu_custom_call.1} parent=5 // pred_region
        %s186 = ssub.s32 %s15, 1
        // Predicated region
        $region29: #{tpu_custom_call.1} parent=27 // pred_check
          %p187 = pneg %p62
        $region30: #{tpu_custom_call.1} parent=27 // pred_check_branch
          %189 = sbr.rel (%p187) target = $region32
        $region31: #{tpu_custom_call.1} parent=27 // pred_region
          %190 = dma.done [#allocation4], 2048
        $region32: #{tpu_custom_call.1} parent=27 // pred_fallthru
          _
        %s191 = sand.u32 %s77, 1
        %s192 = scalar_lea.sflag [#allocation7], %s191
        %s193 = sand.u32 %s77, 1
        %s194 = smul.addr %s193, 1024
        %s195 = scalar_lea.vmem [#allocation6], %s194
        // Predicated region
        $region33: #{tpu_custom_call.1} parent=27 // pred_check
          %p196 = pneg %p90
        $region34: #{tpu_custom_call.1} parent=27 // pred_check_branch
          %198 = sbr.rel (%p196) target = $region36
        $region35: #{tpu_custom_call.1} parent=27 // pred_region
          %199 = dma.done %s192, 16384
        $region36: #{tpu_custom_call.1} parent=27 // pred_fallthru
          _
        %p200 = pneg %p62
        %p201 = pneg %p59
        %s202 = sand.u32 %s77, 1
        %s203 = scalar_lea.sflag [#allocation7], %s202
        %s204 = sand.u32 %s77, 1
        %s205 = smul.addr %s204, 1024
        %s206 = scalar_lea.vmem [#allocation6], %s205
        %p207 = pneg %p90
        %p208 = pneg %p87
        %p209 = pneg %p118
        %p210 = pneg %p115
        %s211 = sand.u32 %s105, 1
        %s212 = scalar_lea.sflag [#allocation5], %s211
        %s213 = sand.u32 %s105, 1
        %s214 = smul.addr %s213, 64
        %s215 = scalar_lea.vmem [#allocation8], %s214
        %s216 = smul.u32 4, %s25
        %s217 = smul.u32 4, %s27
        %s218 = smul.u32 64, %s27
        %s219 = smul.u32 2, %s26
        %s220 = smul.u32 4, %s25
        %s221 = smul.u32 2, %s26
        %p222 = scmp.eq.s32.totalorder %s27, 0
        // Predicated region
        $region37: #{tpu_custom_call.1} parent=27 // pred_check
          %p223 = pneg %p222
        $region38: #{tpu_custom_call.1} parent=27 // pred_check_branch
          %225 = sbr.rel (%p223) target = $region40
        $region39: #{tpu_custom_call.1} parent=27 // pred_region
          %226 = vst [vmem:[#allocation2] sm:$0xff] 0.0
          %227 = vst [vmem:[#allocation2 + $0x8] sm:$0xff] 0.0
          %228 = vst [vmem:[#allocation2 + $0x10] sm:$0xff] 0.0
          %229 = vst [vmem:[#allocation2 + $0x18] sm:$0xff] 0.0
          %230 = vst [vmem:[#allocation2 + $0x20] sm:$0xff] 0.0
          %231 = vst [vmem:[#allocation2 + $0x28] sm:$0xff] 0.0
          %232 = vst [vmem:[#allocation2 + $0x30] sm:$0xff] 0.0
          %233 = vst [vmem:[#allocation2 + $0x38] sm:$0xff] 0.0
        $region40: #{tpu_custom_call.1} parent=27 // pred_fallthru
          _
        %v234 = vld [vmem:[#allocation2] sm:$0xff]
        %v235 = vld [vmem:[#allocation2 + $0x8] sm:$0xff]
        %v236 = vld [vmem:[#allocation2 + $0x10] sm:$0xff]
        %v237 = vld [vmem:[#allocation2 + $0x18] sm:$0xff]
        %v238 = vld [vmem:[#allocation2 + $0x20] sm:$0xff]
        %v239 = vld [vmem:[#allocation2 + $0x28] sm:$0xff]
        %v240 = vld [vmem:[#allocation2 + $0x30] sm:$0xff]
        %v241 = vld [vmem:[#allocation2 + $0x38] sm:$0xff]
        %v242 = vld [vmem:[#allocation3] sm:$0xff]
        %v243 = vld [vmem:[#allocation3 + $0x8] sm:$0xff]
        %v244 = vld [vmem:[#allocation3 + $0x10] sm:$0xff]
        %v245 = vld [vmem:[#allocation3 + $0x18] sm:$0xff]
        %v246 = vld [vmem:[#allocation3 + $0x20] sm:$0xff]
        %v247 = vld [vmem:[#allocation3 + $0x28] sm:$0xff]
        %v248 = vld [vmem:[#allocation3 + $0x30] sm:$0xff]
        %v249 = vld [vmem:[#allocation3 + $0x38] sm:$0xff]
        %v250 = vld [vmem:[#allocation3 + $0x40] sm:$0xff]
        %v251 = vld [vmem:[#allocation3 + $0x48] sm:$0xff]
        %v252 = vld [vmem:[#allocation3 + $0x50] sm:$0xff]
        %v253 = vld [vmem:[#allocation3 + $0x58] sm:$0xff]
        %v254 = vld [vmem:[#allocation3 + $0x60] sm:$0xff]
        %v255 = vld [vmem:[#allocation3 + $0x68] sm:$0xff]
        %v256 = vld [vmem:[#allocation3 + $0x70] sm:$0xff]
        %v257 = vld [vmem:[#allocation3 + $0x78] sm:$0xff]
        %v258 = vld [vmem:[%s195] sm:$0xff]
        %v259 = vld [vmem:[%s195 + $0x8] sm:$0xff]
        %v260 = vld [vmem:[%s195 + $0x10] sm:$0xff]
        %v261 = vld [vmem:[%s195 + $0x18] sm:$0xff]
        %v262 = vld [vmem:[%s195 + $0x20] sm:$0xff]
        %v263 = vld [vmem:[%s195 + $0x28] sm:$0xff]
        %v264 = vld [vmem:[%s195 + $0x30] sm:$0xff]
        %v265 = vld [vmem:[%s195 + $0x38] sm:$0xff]
        %v266 = vld [vmem:[%s195 + $0x40] sm:$0xff]
        %v267 = vld [vmem:[%s195 + $0x48] sm:$0xff]
        %v268 = vld [vmem:[%s195 + $0x50] sm:$0xff]
        %v269 = vld [vmem:[%s195 + $0x58] sm:$0xff]
        %v270 = vld [vmem:[%s195 + $0x60] sm:$0xff]
        %v271 = vld [vmem:[%s195 + $0x68] sm:$0xff]
        %v272 = vld [vmem:[%s195 + $0x70] sm:$0xff]
        %v273 = vld [vmem:[%s195 + $0x78] sm:$0xff]
        %v274 = vld [vmem:[%s195 + $0x80] sm:$0xff]
        %v275 = vld [vmem:[%s195 + $0x88] sm:$0xff]
        %v276 = vld [vmem:[%s195 + $0x90] sm:$0xff]
        %v277 = vld [vmem:[%s195 + $0x98] sm:$0xff]
        %v278 = vld [vmem:[%s195 + $0xa0] sm:$0xff]
        %v279 = vld [vmem:[%s195 + $0xa8] sm:$0xff]
        %v280 = vld [vmem:[%s195 + $0xb0] sm:$0xff]
        %v281 = vld [vmem:[%s195 + $0xb8] sm:$0xff]
        %v282 = vld [vmem:[%s195 + $0xc0] sm:$0xff]
        %v283 = vld [vmem:[%s195 + $0xc8] sm:$0xff]
        %v284 = vld [vmem:[%s195 + $0xd0] sm:$0xff]
        %v285 = vld [vmem:[%s195 + $0xd8] sm:$0xff]
        %v286 = vld [vmem:[%s195 + $0xe0] sm:$0xff]
        %v287 = vld [vmem:[%s195 + $0xe8] sm:$0xff]
        %v288 = vld [vmem:[%s195 + $0xf0] sm:$0xff]
        %v289 = vld [vmem:[%s195 + $0xf8] sm:$0xff]
        %v290 = vld [vmem:[%s195 + $0x100] sm:$0xff]
        %v291 = vld [vmem:[%s195 + $0x108] sm:$0xff]
        %v292 = vld [vmem:[%s195 + $0x110] sm:$0xff]
        %v293 = vld [vmem:[%s195 + $0x118] sm:$0xff]
        %v294 = vld [vmem:[%s195 + $0x120] sm:$0xff]
        %v295 = vld [vmem:[%s195 + $0x128] sm:$0xff]
        %v296 = vld [vmem:[%s195 + $0x130] sm:$0xff]
        %v297 = vld [vmem:[%s195 + $0x138] sm:$0xff]
        %v298 = vld [vmem:[%s195 + $0x140] sm:$0xff]
        %v299 = vld [vmem:[%s195 + $0x148] sm:$0xff]
        %v300 = vld [vmem:[%s195 + $0x150] sm:$0xff]
        %v301 = vld [vmem:[%s195 + $0x158] sm:$0xff]
        %v302 = vld [vmem:[%s195 + $0x160] sm:$0xff]
        %v303 = vld [vmem:[%s195 + $0x168] sm:$0xff]
        %v304 = vld [vmem:[%s195 + $0x170] sm:$0xff]
        %v305 = vld [vmem:[%s195 + $0x178] sm:$0xff]
        %v306 = vld [vmem:[%s195 + $0x180] sm:$0xff]
        %v307 = vld [vmem:[%s195 + $0x188] sm:$0xff]
        %v308 = vld [vmem:[%s195 + $0x190] sm:$0xff]
        %v309 = vld [vmem:[%s195 + $0x198] sm:$0xff]
        %v310 = vld [vmem:[%s195 + $0x1a0] sm:$0xff]
        %v311 = vld [vmem:[%s195 + $0x1a8] sm:$0xff]
        %v312 = vld [vmem:[%s195 + $0x1b0] sm:$0xff]
        %v313 = vld [vmem:[%s195 + $0x1b8] sm:$0xff]
        %v314 = vld [vmem:[%s195 + $0x1c0] sm:$0xff]
        %v315 = vld [vmem:[%s195 + $0x1c8] sm:$0xff]
        %v316 = vld [vmem:[%s195 + $0x1d0] sm:$0xff]
        %v317 = vld [vmem:[%s195 + $0x1d8] sm:$0xff]
        %v318 = vld [vmem:[%s195 + $0x1e0] sm:$0xff]
        %v319 = vld [vmem:[%s195 + $0x1e8] sm:$0xff]
        %v320 = vld [vmem:[%s195 + $0x1f0] sm:$0xff]
        %v321 = vld [vmem:[%s195 + $0x1f8] sm:$0xff]
        %v322 = vld [vmem:[%s195 + $0x200] sm:$0xff]
        %v323 = vld [vmem:[%s195 + $0x208] sm:$0xff]
        %v324 = vld [vmem:[%s195 + $0x210] sm:$0xff]
        %v325 = vld [vmem:[%s195 + $0x218] sm:$0xff]
        %v326 = vld [vmem:[%s195 + $0x220] sm:$0xff]
        %v327 = vld [vmem:[%s195 + $0x228] sm:$0xff]
        %v328 = vld [vmem:[%s195 + $0x230] sm:$0xff]
        %v329 = vld [vmem:[%s195 + $0x238] sm:$0xff]
        %v330 = vld [vmem:[%s195 + $0x240] sm:$0xff]
        %v331 = vld [vmem:[%s195 + $0x248] sm:$0xff]
        %v332 = vld [vmem:[%s195 + $0x250] sm:$0xff]
        %v333 = vld [vmem:[%s195 + $0x258] sm:$0xff]
        %v334 = vld [vmem:[%s195 + $0x260] sm:$0xff]
        %v335 = vld [vmem:[%s195 + $0x268] sm:$0xff]
        %v336 = vld [vmem:[%s195 + $0x270] sm:$0xff]
        %v337 = vld [vmem:[%s195 + $0x278] sm:$0xff]
        %v338 = vld [vmem:[%s195 + $0x280] sm:$0xff]
        %v339 = vld [vmem:[%s195 + $0x288] sm:$0xff]
        %v340 = vld [vmem:[%s195 + $0x290] sm:$0xff]
        %v341 = vld [vmem:[%s195 + $0x298] sm:$0xff]
        %v342 = vld [vmem:[%s195 + $0x2a0] sm:$0xff]
        %v343 = vld [vmem:[%s195 + $0x2a8] sm:$0xff]
        %v344 = vld [vmem:[%s195 + $0x2b0] sm:$0xff]
        %v345 = vld [vmem:[%s195 + $0x2b8] sm:$0xff]
        %v346 = vld [vmem:[%s195 + $0x2c0] sm:$0xff]
        %v347 = vld [vmem:[%s195 + $0x2c8] sm:$0xff]
        %v348 = vld [vmem:[%s195 + $0x2d0] sm:$0xff]
        %v349 = vld [vmem:[%s195 + $0x2d8] sm:$0xff]
        %v350 = vld [vmem:[%s195 + $0x2e0] sm:$0xff]
        %v351 = vld [vmem:[%s195 + $0x2e8] sm:$0xff]
        %v352 = vld [vmem:[%s195 + $0x2f0] sm:$0xff]
        %v353 = vld [vmem:[%s195 + $0x2f8] sm:$0xff]
        %v354 = vld [vmem:[%s195 + $0x300] sm:$0xff]
        %v355 = vld [vmem:[%s195 + $0x308] sm:$0xff]
        %v356 = vld [vmem:[%s195 + $0x310] sm:$0xff]
        %v357 = vld [vmem:[%s195 + $0x318] sm:$0xff]
        %v358 = vld [vmem:[%s195 + $0x320] sm:$0xff]
        %v359 = vld [vmem:[%s195 + $0x328] sm:$0xff]
        %v360 = vld [vmem:[%s195 + $0x330] sm:$0xff]
        %v361 = vld [vmem:[%s195 + $0x338] sm:$0xff]
        %v362 = vld [vmem:[%s195 + $0x340] sm:$0xff]
        %v363 = vld [vmem:[%s195 + $0x348] sm:$0xff]
        %v364 = vld [vmem:[%s195 + $0x350] sm:$0xff]
        %v365 = vld [vmem:[%s195 + $0x358] sm:$0xff]
        %v366 = vld [vmem:[%s195 + $0x360] sm:$0xff]
        %v367 = vld [vmem:[%s195 + $0x368] sm:$0xff]
        %v368 = vld [vmem:[%s195 + $0x370] sm:$0xff]
        %v369 = vld [vmem:[%s195 + $0x378] sm:$0xff]
        %v370 = vld [vmem:[%s195 + $0x380] sm:$0xff]
        %v371 = vld [vmem:[%s195 + $0x388] sm:$0xff]
        %v372 = vld [vmem:[%s195 + $0x390] sm:$0xff]
        %v373 = vld [vmem:[%s195 + $0x398] sm:$0xff]
        %v374 = vld [vmem:[%s195 + $0x3a0] sm:$0xff]
        %v375 = vld [vmem:[%s195 + $0x3a8] sm:$0xff]
        %v376 = vld [vmem:[%s195 + $0x3b0] sm:$0xff]
        %v377 = vld [vmem:[%s195 + $0x3b8] sm:$0xff]
        %v378 = vld [vmem:[%s195 + $0x3c0] sm:$0xff]
        %v379 = vld [vmem:[%s195 + $0x3c8] sm:$0xff]
        %v380 = vld [vmem:[%s195 + $0x3d0] sm:$0xff]
        %v381 = vld [vmem:[%s195 + $0x3d8] sm:$0xff]
        %v382 = vld [vmem:[%s195 + $0x3e0] sm:$0xff]
        %v383 = vld [vmem:[%s195 + $0x3e8] sm:$0xff]
        %v384 = vld [vmem:[%s195 + $0x3f0] sm:$0xff]
        %v385 = vld [vmem:[%s195 + $0x3f8] sm:$0xff]
        %386 = vmatprep.subr.mxu0 %v259
        %387 = vmatpush1.msra.mxu0 %v258
        %388 = vmatprep.subr.mxu0 %v261
        %389 = vmatpush1.msra.mxu0 %v260
        %390 = vmatprep.subr.mxu0 %v263
        %391 = vmatpush1.msra.mxu0 %v262
        %392 = vmatprep.subr.mxu0 %v265
        %393 = vmatpush1.msra.mxu0 %v264
        %394 = vmatprep.subr.mxu0 %v267
        %395 = vmatpush1.msra.mxu0 %v266
        %396 = vmatprep.subr.mxu0 %v269
        %397 = vmatpush1.msra.mxu0 %v268
        %398 = vmatprep.subr.mxu0 %v271
        %399 = vmatpush1.msra.mxu0 %v270
        %400 = vmatprep.subr.mxu0 %v273
        %401 = vmatpush1.msra.mxu0 %v272
        %402 = vmatprep.subr.mxu0 %v275
        %403 = vmatpush1.msra.mxu0 %v274
        %404 = vmatprep.subr.mxu0 %v277
        %405 = vmatpush1.msra.mxu0 %v276
        %406 = vmatprep.subr.mxu0 %v279
        %407 = vmatpush1.msra.mxu0 %v278
        %408 = vmatprep.subr.mxu0 %v281
        %409 = vmatpush1.msra.mxu0 %v280
        %410 = vmatprep.subr.mxu0 %v283
        %411 = vmatpush1.msra.mxu0 %v282
        %412 = vmatprep.subr.mxu0 %v285
        %413 = vmatpush1.msra.mxu0 %v284
        %414 = vmatprep.subr.mxu0 %v287
        %415 = vmatpush1.msra.mxu0 %v286
        %416 = vmatprep.subr.mxu0 %v289
        %417 = vmatpush1.msra.mxu0 %v288
        %418 = vmatprep.subr.mxu0 %v291
        %419 = vmatpush1.msra.mxu0 %v290
        %420 = vmatprep.subr.mxu0 %v293
        %421 = vmatpush1.msra.mxu0 %v292
        %422 = vmatprep.subr.mxu0 %v295
        %423 = vmatpush1.msra.mxu0 %v294
        %424 = vmatprep.subr.mxu0 %v297
        %425 = vmatpush1.msra.mxu0 %v296
        %426 = vmatprep.subr.mxu0 %v299
        %427 = vmatpush1.msra.mxu0 %v298
        %428 = vmatprep.subr.mxu0 %v301
        %429 = vmatpush1.msra.mxu0 %v300
        %430 = vmatprep.subr.mxu0 %v303
        %431 = vmatpush1.msra.mxu0 %v302
        %432 = vmatprep.subr.mxu0 %v305
        %433 = vmatpush1.msra.mxu0 %v304
        %434 = vmatprep.subr.mxu0 %v307
        %435 = vmatpush1.msra.mxu0 %v306
        %436 = vmatprep.subr.mxu0 %v309
        %437 = vmatpush1.msra.mxu0 %v308
        %438 = vmatprep.subr.mxu0 %v311
        %439 = vmatpush1.msra.mxu0 %v310
        %440 = vmatprep.subr.mxu0 %v313
        %441 = vmatpush1.msra.mxu0 %v312
        %442 = vmatprep.subr.mxu0 %v315
        %443 = vmatpush1.msra.mxu0 %v314
        %444 = vmatprep.subr.mxu0 %v317
        %445 = vmatpush1.msra.mxu0 %v316
        %446 = vmatprep.subr.mxu0 %v319
        %447 = vmatpush1.msra.mxu0 %v318
        %448 = vmatprep.subr.mxu0 %v321
        %449 = vmatpush1.msra.mxu0 %v320
        %450 = vmatprep.mubr.f32.mxu0 %v243
        %451 = vmatmul.mubr.f32.gmra.mrb[0].mxu0 %v242
        %v452 = vpop.f32.mrb[0].mxu0
        %v453 = vadd.f32 0.0, %v452
        %v454 = vpop.f32.mrb[0].mxu0
        %v455 = vadd.f32 0.0, %v454
        %456 = vmatprep.mubr.f32.mxu0 %v247
        %457 = vmatmul.mubr.f32.gmra.mrb[0].mxu0 %v246
        %v458 = vpop.f32.mrb[0].mxu0
        %v459 = vadd.f32 0.0, %v458
        %v460 = vpop.f32.mrb[0].mxu0
        %v461 = vadd.f32 0.0, %v460
        %462 = vmatprep.mubr.f32.mxu0 %v251
        %463 = vmatmul.mubr.f32.gmra.mrb[0].mxu0 %v250
        %v464 = vpop.f32.mrb[0].mxu0
        %v465 = vadd.f32 0.0, %v464
        %v466 = vpop.f32.mrb[0].mxu0
        %v467 = vadd.f32 0.0, %v466
        %468 = vmatprep.mubr.f32.mxu0 %v255
        %469 = vmatmul.mubr.f32.gmra.mrb[0].mxu0 %v254
        %v470 = vpop.f32.mrb[0].mxu0
        %v471 = vadd.f32 0.0, %v470
        %v472 = vpop.f32.mrb[0].mxu0
        %v473 = vadd.f32 0.0, %v472
        %474 = vdwg.mxu0
        %475 = vmatprep.subr.mxu0 %v323
        %476 = vmatpush1.msra.mxu0 %v322
        %477 = vmatprep.subr.mxu0 %v325
        %478 = vmatpush1.msra.mxu0 %v324
        %479 = vmatprep.subr.mxu0 %v327
        %480 = vmatpush1.msra.mxu0 %v326
        %481 = vmatprep.subr.mxu0 %v329
        %482 = vmatpush1.msra.mxu0 %v328
        %483 = vmatprep.subr.mxu0 %v331
        %484 = vmatpush1.msra.mxu0 %v330
        %485 = vmatprep.subr.mxu0 %v333
        %486 = vmatpush1.msra.mxu0 %v332
        %487 = vmatprep.subr.mxu0 %v335
        %488 = vmatpush1.msra.mxu0 %v334
        %489 = vmatprep.subr.mxu0 %v337
        %490 = vmatpush1.msra.mxu0 %v336
        %491 = vmatprep.subr.mxu0 %v339
        %492 = vmatpush1.msra.mxu0 %v338
        %493 = vmatprep.subr.mxu0 %v341
        %494 = vmatpush1.msra.mxu0 %v340
        %495 = vmatprep.subr.mxu0 %v343
        %496 = vmatpush1.msra.mxu0 %v342
        %497 = vmatprep.subr.mxu0 %v345
        %498 = vmatpush1.msra.mxu0 %v344
        %499 = vmatprep.subr.mxu0 %v347
        %500 = vmatpush1.msra.mxu0 %v346
        %501 = vmatprep.subr.mxu0 %v349
        %502 = vmatpush1.msra.mxu0 %v348
        %503 = vmatprep.subr.mxu0 %v351
        %504 = vmatpush1.msra.mxu0 %v350
        %505 = vmatprep.subr.mxu0 %v353
        %506 = vmatpush1.msra.mxu0 %v352
        %507 = vmatprep.subr.mxu0 %v355
        %508 = vmatpush1.msra.mxu0 %v354
        %509 = vmatprep.subr.mxu0 %v357
        %510 = vmatpush1.msra.mxu0 %v356
        %511 = vmatprep.subr.mxu0 %v359
        %512 = vmatpush1.msra.mxu0 %v358
        %513 = vmatprep.subr.mxu0 %v361
        %514 = vmatpush1.msra.mxu0 %v360
        %515 = vmatprep.subr.mxu0 %v363
        %516 = vmatpush1.msra.mxu0 %v362
        %517 = vmatprep.subr.mxu0 %v365
        %518 = vmatpush1.msra.mxu0 %v364
        %519 = vmatprep.subr.mxu0 %v367
        %520 = vmatpush1.msra.mxu0 %v366
        %521 = vmatprep.subr.mxu0 %v369
        %522 = vmatpush1.msra.mxu0 %v368
        %523 = vmatprep.subr.mxu0 %v371
        %524 = vmatpush1.msra.mxu0 %v370
        %525 = vmatprep.subr.mxu0 %v373
        %526 = vmatpush1.msra.mxu0 %v372
        %527 = vmatprep.subr.mxu0 %v375
        %528 = vmatpush1.msra.mxu0 %v374
        %529 = vmatprep.subr.mxu0 %v377
        %530 = vmatpush1.msra.mxu0 %v376
        %531 = vmatprep.subr.mxu0 %v379
        %532 = vmatpush1.msra.mxu0 %v378
        %533 = vmatprep.subr.mxu0 %v381
        %534 = vmatpush1.msra.mxu0 %v380
        %535 = vmatprep.subr.mxu0 %v383
        %536 = vmatpush1.msra.mxu0 %v382
        %537 = vmatprep.subr.mxu0 %v385
        %538 = vmatpush1.msra.mxu0 %v384
        %539 = vmatprep.mubr.f32.mxu0 %v245
        %540 = vmatmul.mubr.f32.gmra.mrb[0].mxu0 %v244
        %v541 = vpop.f32.mrb[0].mxu0
        %v542 = vadd.f32 %v453, %v541
        %v543 = vpop.f32.mrb[0].mxu0
        %v544 = vadd.f32 %v455, %v543
        %545 = vmatprep.mubr.f32.mxu0 %v249
        %546 = vmatmul.mubr.f32.gmra.mrb[0].mxu0 %v248
        %v547 = vpop.f32.mrb[0].mxu0
        %v548 = vadd.f32 %v459, %v547
        %v549 = vpop.f32.mrb[0].mxu0
        %v550 = vadd.f32 %v461, %v549
        %551 = vmatprep.mubr.f32.mxu0 %v253
        %552 = vmatmul.mubr.f32.gmra.mrb[0].mxu0 %v252
        %v553 = vpop.f32.mrb[0].mxu0
        %v554 = vadd.f32 %v465, %v553
        %v555 = vpop.f32.mrb[0].mxu0
        %v556 = vadd.f32 %v467, %v555
        %557 = vmatprep.mubr.f32.mxu0 %v257
        %558 = vmatmul.mubr.f32.gmra.mrb[0].mxu0 %v256
        %v559 = vpop.f32.mrb[0].mxu0
        %v560 = vadd.f32 %v471, %v559
        %v561 = vpop.f32.mrb[0].mxu0
        %v562 = vadd.f32 %v473, %v561
        %563 = vdwg.mxu0
        %v564 = vadd.f32 %v234, %v542
        %v565 = vadd.f32 %v235, %v544
        %v566 = vadd.f32 %v236, %v548
        %v567 = vadd.f32 %v237, %v550
        %v568 = vadd.f32 %v238, %v554
        %v569 = vadd.f32 %v239, %v556
        %v570 = vadd.f32 %v240, %v560
        %v571 = vadd.f32 %v241, %v562
        %572 = vst [vmem:[#allocation2] sm:$0xff] %v564
        %573 = vst [vmem:[#allocation2 + $0x8] sm:$0xff] %v565
        %574 = vst [vmem:[#allocation2 + $0x10] sm:$0xff] %v566
        %575 = vst [vmem:[#allocation2 + $0x18] sm:$0xff] %v567
        %576 = vst [vmem:[#allocation2 + $0x20] sm:$0xff] %v568
        %577 = vst [vmem:[#allocation2 + $0x28] sm:$0xff] %v569
        %578 = vst [vmem:[#allocation2 + $0x30] sm:$0xff] %v570
        %579 = vst [vmem:[#allocation2 + $0x38] sm:$0xff] %v571
        // Predicated region
        $region41: #{tpu_custom_call.1} parent=27 // pred_check
          %p580 = pneg %p222
        $region42: #{tpu_custom_call.1} parent=27 // pred_check_branch
          %582 = sbr.rel (%p580) target = $region44
        $region43: #{tpu_custom_call.1} parent=27 // pred_region
          %v583 = vld [vmem:[#allocation2] sm:$0xff]
          %v584 = vld [vmem:[#allocation2 + $0x8] sm:$0xff]
          %v585 = vld [vmem:[#allocation2 + $0x10] sm:$0xff]
          %v586 = vld [vmem:[#allocation2 + $0x18] sm:$0xff]
          %v587 = vld [vmem:[#allocation2 + $0x20] sm:$0xff]
          %v588 = vld [vmem:[#allocation2 + $0x28] sm:$0xff]
          %v589 = vld [vmem:[#allocation2 + $0x30] sm:$0xff]
          %v590 = vld [vmem:[#allocation2 + $0x38] sm:$0xff]
          %591 = vst [vmem:[%s215] sm:$0xff] %v583
          %592 = vst [vmem:[%s215 + $0x8] sm:$0xff] %v584
          %593 = vst [vmem:[%s215 + $0x10] sm:$0xff] %v585
          %594 = vst [vmem:[%s215 + $0x18] sm:$0xff] %v586
          %595 = vst [vmem:[%s215 + $0x20] sm:$0xff] %v587
          %596 = vst [vmem:[%s215 + $0x28] sm:$0xff] %v588
          %597 = vst [vmem:[%s215 + $0x30] sm:$0xff] %v589
          %598 = vst [vmem:[%s215 + $0x38] sm:$0xff] %v590
        $region44: #{tpu_custom_call.1} parent=27 // pred_fallthru
          _
        %s599 = sand.u32 %s105, 1
        %s600 = scalar_lea.sflag [#allocation5], %s599
        %s601 = sand.u32 %s105, 1
        %s602 = smul.addr %s601, 64
        %s603 = scalar_lea.vmem [#allocation8], %s602
        // Predicated region
        $region45: #{tpu_custom_call.1} parent=27 // pred_check
          %p604 = pneg %p115
        $region46: #{tpu_custom_call.1} parent=27 // pred_check_branch
          %606 = sbr.rel (%p604) target = $region48
        $region47: #{tpu_custom_call.1} parent=27 // pred_region
          %s607 = smul.u32 4, %s25
          %s608 = smul.u32 2, %s26
          %s610 = ssub.s32 1024, 1024
          %611 = vsyncadd %s600, %s610
          %s612 = smul.addr %s607, 8
          %s613 = sadd.s32 %s608, %s612
          %s614 = smul.addr %s613, 128
          %s615 = scalar_lea.hbm %s2, %s614
          %s616 = sshll.u32 %s603, 4
          %s617 = int_to_ptr.vmem [resolvable:$true] %s616
          %622 = dma.vmem_to_hbm [thread:$0]  %s617, 1024, %s615, %s600, 256, 1024, 16
        $region48: #{tpu_custom_call.1} parent=27 // pred_fallthru
          _
      $region28: #{tpu_custom_call.1} parent=5 // pred_fallthru
        _
      %p623 = scmp.le.s32.totalorder 2, %s15
      // Predicated region
      $region49: #{tpu_custom_call.1} parent=5 // pred_check
        %p624 = pneg %p623
      $region50: #{tpu_custom_call.1} parent=5 // pred_check_branch
        %626 = sbr.rel (%p624) target = $region52
      $region51: #{tpu_custom_call.1} parent=5 // pred_region
        %s627 = ssub.s32 %s15, 2
        // Predicated region
        $region53: #{tpu_custom_call.1} parent=51 // pred_check
          %p628 = pneg %p121
        $region54: #{tpu_custom_call.1} parent=51 // pred_check_branch
          %630 = sbr.rel (%p628) target = $region56
        $region55: #{tpu_custom_call.1} parent=51 // pred_region
          %s631 = sand.u32 %s106, 1
          %s632 = scalar_lea.sflag [#allocation5], %s631
          %s633 = sand.u32 %s106, 1
          %s634 = smul.addr %s633, 64
          %s635 = scalar_lea.vmem [#allocation8], %s634
          %636 = dma.done %s632, 1024
        $region56: #{tpu_custom_call.1} parent=51 // pred_fallthru
          _
      $region52: #{tpu_custom_call.1} parent=5 // pred_fallthru
        _
    $region6: #{tpu_custom_call.1} parent=1 // loop_footer
      %s19 = sadd.s32 1, %s15
    $region7: #{tpu_custom_call.1} parent=1 // loop_footer_branch
      %14 = sbr.rel target = $region3
    $region8: #{tpu_custom_call.1} parent=1 // loop_exit
      _
    %637 = vsyncpa [#allocation4], 1
    %s638 = scalar_lea.sflag [#allocation4], 1
    %639 = vsyncpa %s638, 1
    %640 = vsyncpa [#allocation7], 1
    %s641 = scalar_lea.sflag [#allocation7], 1
    %642 = vsyncpa %s641, 1
    %643 = vsyncpa [#allocation5], 1
    %s644 = scalar_lea.sflag [#allocation5], 1
    %645 = vsyncpa %s644, 1

</llo_original>
